<compile_context>
chip_gen: v6e
topology: v6e:2x2x1
jax: 0.10.0
libtpu: 0.0.40
codegen_flags: <defaults>
</compile_context>

<pallas_src>
import functools

import jax
import jax.numpy as jnp
from jax.experimental import pallas as pl
from jax.experimental.pallas import tpu as pltpu


LANE = 128


def _round_up(n, m):
    return (n + m - 1) // m * m


def _vmem_budget_bytes():
    """~75% of the physical per-core VMEM (48 MiB on v7x, ~96 MiB on v5e/v6e)."""
    try:
        cap = pltpu.get_tpu_info().vmem_capacity_bytes
    except Exception:
        cap = 64 << 20  # conservative (v7x-sized) fallback if query unavailable
    return int(cap) * 3 // 4


def _choose_tiles(M, d_model, d_ff, cbytes, out_bytes, vmem_budget):
    """Static (Python-level) tile selection, generation-aware via vmem_budget."""
    sub = {1: 32, 2: 16}.get(cbytes, 8)          # sublane multiple for compute dtype
    d_ff128 = _round_up(d_ff, LANE)

    # tile_ff: keep both weight slabs fully VMEM-resident when they fit (f grid
    # extent 1 => constant weight index maps => no re-DMA across row tiles);
    # otherwise slab in multiples of 256 (dense on v6e/v7x 256x256 MXU arrays).
    w_bytes_per_col = 2 * d_model * cbytes        # one W1T column + one W2T row
    if 2 * d_ff128 * w_bytes_per_col <= vmem_budget // 2:
        tile_ff = d_ff128
    else:
        tile_ff = max(256, ((vmem_budget // 2) // (2 * w_bytes_per_col)) // 256 * 256)
        tile_ff = min(tile_ff, d_ff128)

    # tile_m: large for MXU occupancy / flops-per-weight-byte; clamp for small M.
    tile_m = min(512, _round_up(M, sub))

    def vmem_bytes(tm, tf):
        return (2 * tm * d_model * cbytes          # x tile (double-buffered)
                + 2 * tm * d_model * out_bytes     # out tile
                + 2 * d_model * tf * cbytes        # W1T slab
                + 2 * tf * d_model * cbytes        # W2T slab
                + 2 * tf * 4 + 2 * d_model * 4     # biases (f32)
                + tm * d_model * 4                 # f32 accumulator scratch
                + tm * tf * (4 + cbytes)           # h (f32) + its cast copy
                + (2 << 20))                       # Mosaic internal headroom

    # Over budget: shrink tile_ff first (keeps per-weight-byte intensity ~tile_m),
    # then tile_m, then tile_ff down to a single lane group as a last resort.
    while vmem_bytes(tile_m, tile_ff) > vmem_budget and tile_ff > 256:
        tile_ff = max(256, (tile_ff // 2) // LANE * LANE)
    while vmem_bytes(tile_m, tile_ff) > vmem_budget and tile_m > sub:
        tile_m = max(sub, _round_up(tile_m // 2, sub))
    while vmem_bytes(tile_m, tile_ff) > vmem_budget and tile_ff > LANE:
        tile_ff = max(LANE, (tile_ff // 2) // LANE * LANE)

    # Give the "parallel" M axis >= 2 steps when possible (v7x has 2 TensorCores).
    if _round_up(M, tile_m) // tile_m < 2 and tile_m >= 2 * sub:
        tile_m = _round_up(tile_m // 2, sub)

    d_ff_pad = _round_up(d_ff128, tile_ff)
    return tile_m, tile_ff, d_ff_pad


def ffn_kernel(x_ref, w1_ref, b1_ref, w2_ref, b2_ref, o_ref, acc_ref):
    # x_ref:  (TM, D) bf16     w1_ref: (D, TF) bf16   b1_ref: (1, TF) f32
    # w2_ref: (TF, D) bf16     b2_ref: (1, D)  f32
    # o_ref:  (TM, D) out dt   acc_ref: (TM, D) f32
    f = pl.program_id(1)

    @pl.when(f == 0)
    def _():
        acc_ref[...] = jnp.zeros_like(acc_ref)

    # matmul-1: plain (M,K)x(K,N) on the MXU, f32 accumulation.
    h = jnp.dot(x_ref[...], w1_ref[...], preferred_element_type=jnp.float32)
    h = jnp.maximum(h + b1_ref[...], 0.0)      # bias + ReLU in f32 (VPU)
    # Dropout: inference-mode identity (nn.Dropout is a no-op in eval()).
    # TODO(synk): training-mode dropout would use pltpu.prng_seed + prng_random_bits.

    # matmul-2 partial product over this d_ff slab, accumulated in f32.
    acc_ref[...] += jnp.dot(h.astype(w2_ref.dtype), w2_ref[...],
                            preferred_element_type=jnp.float32)

    @pl.when(f == pl.num_programs(1) - 1)
    def _():
        o_ref[...] = (acc_ref[...] + b2_ref[...]).astype(o_ref.dtype)


@functools.partial(
    jax.jit,
    static_argnames=("tile_m", "tile_ff", "d_ff_pad", "vmem_limit", "compute_dtype"),
)
def _ffn_call(x, w1, b1, w2, b2, *, tile_m, tile_ff, d_ff_pad, vmem_limit,
              compute_dtype):
    B, S, d_model = x.shape
    d_ff = w1.shape[0]
    M = B * S
    M_pad = _round_up(M, tile_m)
    cdt = jnp.dtype(compute_dtype)
    cbytes = cdt.itemsize

    # One-time wrapper-side cast/transpose/pad (fused by XLA; amortized over the
    # whole kernel). Padded rows/columns are zeros and contribute nothing real.
    x2d = x.reshape(M, d_model).astype(cdt)
    if M_pad != M:
        x2d = jnp.pad(x2d, ((0, M_pad - M), (0, 0)))
    w1t = w1.T.astype(cdt)                       # [d_model, d_ff]
    w2t = w2.T.astype(cdt)                       # [d_ff, d_model]
    b1r = b1.astype(jnp.float32).reshape(1, d_ff)
    b2r = b2.astype(jnp.float32).reshape(1, d_model)
    if d_ff_pad != d_ff:
        w1t = jnp.pad(w1t, ((0, 0), (0, d_ff_pad - d_ff)))
        w2t = jnp.pad(w2t, ((0, d_ff_pad - d_ff), (0, 0)))
        b1r = jnp.pad(b1r, ((0, 0), (0, d_ff_pad - d_ff)))

    grid_m = M_pad // tile_m
    f_steps = d_ff_pad // tile_ff
    grid = (grid_m, f_steps)

    # HBM byte estimate includes the weight re-streaming factor when the f axis
    # is sliced (weights re-fetched once per row tile).
    w_stream = grid_m if f_steps > 1 else 1
    cost = pl.CostEstimate(
        flops=2 * 2 * M_pad * d_model * d_ff_pad,
        transcendentals=0,
        bytes_accessed=(M_pad * d_model * (cbytes + x.dtype.itemsize)
                        + w_stream * 2 * d_ff_pad * d_model * cbytes
                        + w_stream * d_ff_pad * 4 + d_model * 4),
    )

    out2d = pl.pallas_call(
        ffn_kernel,
        out_shape=jax.ShapeDtypeStruct((M_pad, d_model), x.dtype),
        grid_spec=pltpu.PrefetchScalarGridSpec(
            num_scalar_prefetch=0,
            grid=grid,
            in_specs=[
                pl.BlockSpec((tile_m, d_model), lambda i, f: (i, 0)),    # x rows
                pl.BlockSpec((d_model, tile_ff), lambda i, f: (0, f)),   # W1^T slab
                pl.BlockSpec((1, tile_ff), lambda i, f: (0, f)),         # b1 slab
                pl.BlockSpec((tile_ff, d_model), lambda i, f: (f, 0)),   # W2^T slab
                pl.BlockSpec((1, d_model), lambda i, f: (0, 0)),         # b2
            ],
            out_specs=pl.BlockSpec((tile_m, d_model), lambda i, f: (i, 0)),
            scratch_shapes=[pltpu.VMEM((tile_m, d_model), jnp.float32)],
        ),
        compiler_params=pltpu.CompilerParams(
            dimension_semantics=("parallel", "arbitrary"),
            vmem_limit_bytes=int(vmem_limit),
        ),
        cost_estimate=cost,
    )(x2d, w1t, b1r, w2t, b2r)

    return out2d[:M].reshape(B, S, d_model)


def feed_forward(x, w1, b1, w2, b2, *, compute_dtype="bfloat16"):
    """x: [B, S, d_model]; w1: [d_ff, d_model]; b1: [d_ff];
    w2: [d_model, d_ff]; b2: [d_model]  (PyTorch nn.Linear weight layout)."""
    B, S, d_model = x.shape
    d_ff = w1.shape[0]
    M = B * S
    cbytes = jnp.dtype(compute_dtype).itemsize
    budget = _vmem_budget_bytes()
    tile_m, tile_ff, d_ff_pad = _choose_tiles(
        M, d_model, d_ff, cbytes, x.dtype.itemsize, budget)
    return _ffn_call(x, w1, b1, w2, b2,
                     tile_m=tile_m, tile_ff=tile_ff, d_ff_pad=d_ff_pad,
                     vmem_limit=budget, compute_dtype=compute_dtype)


def init_params(key, d_model, d_ff):
    """Deterministic init mimicking nn.Linear's U(-1/sqrt(fan_in), 1/sqrt(fan_in))."""
    k1, k2, k3, k4 = jax.random.split(key, 4)
    lim1 = 1.0 / jnp.sqrt(d_model)
    lim2 = 1.0 / jnp.sqrt(d_ff)
    w1 = jax.random.uniform(k1, (d_ff, d_model), jnp.float32, -lim1, lim1)
    b1 = jax.random.uniform(k2, (d_ff,), jnp.float32, -lim1, lim1)
    w2 = jax.random.uniform(k3, (d_model, d_ff), jnp.float32, -lim2, lim2)
    b2 = jax.random.uniform(k4, (d_model,), jnp.float32, -lim2, lim2)
    return w1, b1, w2, b2


if __name__ == "__main__":
    # FeedForward(d_model=128, d_ff=128) -- lane-dense (multiple-of-128) feature dims.
    d_model, d_ff = 128, 128
    B, S = 2, 8

    key = jax.random.PRNGKey(0)
    kx, kp = jax.random.split(key)
    x = jax.random.normal(kx, (B, S, d_model), jnp.float32)
    w1, b1, w2, b2 = init_params(kp, d_model, d_ff)

    out = feed_forward(x, w1, b1, w2, b2)
    out = jax.block_until_ready(out)
    assert out.shape == (B, S, d_model)

    # Strict check against a bf16-input / f32-accumulation reference (matches
    # what the kernel computes numerically).
    xb = x.astype(jnp.bfloat16)
    w1b = w1.astype(jnp.bfloat16)
    w2b = w2.astype(jnp.bfloat16)
    h = jnp.maximum(
        jnp.einsum("bsd,fd->bsf", xb, w1b, preferred_element_type=jnp.float32) + b1,
        0.0)
    ref_bf = jnp.einsum("bsf,df->bsd", h.astype(jnp.bfloat16), w2b,
                        preferred_element_type=jnp.float32) + b2
    assert jnp.allclose(out, ref_bf, atol=2e-3, rtol=2e-3)

    # Loose check against the pure-f32 PyTorch-equivalent reference (bf16 rounding
    # of activations/weights is the only expected divergence).
    ref_f32 = jnp.maximum(x @ w1.T + b1, 0.0) @ w2.T + b2
    assert jnp.allclose(out, ref_f32, atol=5e-2, rtol=5e-2)

    print("KERNEL_OK")
</pallas_src>

<mosaic_0001>
module attributes {stable_mosaic.version = 11 : i64} {
  func.func @ffn_kernel(%arg0: i32, %arg1: i32, %arg2: memref<16x128xbf16, #tpu.memory_space<vmem>>, %arg3: memref<128x128xbf16, #tpu.memory_space<vmem>>, %arg4: memref<1x128xf32, #tpu.memory_space<vmem>>, %arg5: memref<128x128xbf16, #tpu.memory_space<vmem>>, %arg6: memref<1x128xf32, #tpu.memory_space<vmem>>, %arg7: memref<16x128xf32, #tpu.memory_space<vmem>>, %arg8: memref<16x128xf32, #tpu.memory_space<vmem>>) attributes {dimension_semantics = [#tpu.dimension_semantics<parallel>, #tpu.dimension_semantics<arbitrary>], iteration_bounds = array<i64: 1, 1>, scalar_prefetch = 0 : i64, scratch_operands = 1 : i64, tpu.core_type = #tpu.core_type<tc>, window_params = [{transform_indices = @transform_0, window_bounds = array<i64: 16, 128>}, {transform_indices = @transform_1, window_bounds = array<i64: 128, 128>}, {transform_indices = @transform_2, window_bounds = array<i64: 1, 128>}, {transform_indices = @transform_3, window_bounds = array<i64: 128, 128>}, {pipeline_mode = #tpu.pipeline_mode<synchronous>, transform_indices = @transform_4, window_bounds = array<i64: 1, 128>}, {transform_indices = @transform_5, window_bounds = array<i64: 16, 128>}]} {
    %c0_i32 = arith.constant 0 : i32
    %0 = arith.cmpi eq, %arg1, %c0_i32 : i32
    %1 = arith.extui %0 : i1 to i32
    %c0_i32_0 = arith.constant 0 : i32
    %2 = arith.cmpi ne, %1, %c0_i32_0 : i32
    scf.if %2 {
      %cst_16 = arith.constant 0.000000e+00 : f32
      %20 = vector.broadcast %cst_16 : f32 to vector<16x128xf32>
      %c0_17 = arith.constant 0 : index
      %c0_18 = arith.constant 0 : index
      %21 = vector.load %arg8[%c0_17, %c0_18] : memref<16x128xf32, #tpu.memory_space<vmem>>, vector<16x128xf32>
      tpu.vector_store %arg8[%c0_17, %c0_18], %20 {strides = array<i32>} : memref<16x128xf32, #tpu.memory_space<vmem>>, vector<16x128xf32>,
    } else {
    }
    %c0 = arith.constant 0 : index
    %c0_1 = arith.constant 0 : index
    %3 = vector.load %arg2[%c0, %c0_1] : memref<16x128xbf16, #tpu.memory_space<vmem>>, vector<16x128xbf16>
    %c0_2 = arith.constant 0 : index
    %c0_3 = arith.constant 0 : index
    %4 = vector.load %arg3[%c0_2, %c0_3] : memref<128x128xbf16, #tpu.memory_space<vmem>>, vector<128x128xbf16>
    %cst = arith.constant dense<0.000000e+00> : vector<16x128xf32>
    %5 = tpu.matmul %3, %4, %cst {dimension_numbers = #tpu.dot_dimension_numbers<[1], [0], [0], [1], [0, 0, 1, 1], [], []>} : vector<16x128xbf16>, vector<128x128xbf16>, vector<16x128xf32> -> vector<16x128xf32>
    %c0_4 = arith.constant 0 : index
    %c0_5 = arith.constant 0 : index
    %6 = vector.load %arg4[%c0_4, %c0_5] : memref<1x128xf32, #tpu.memory_space<vmem>>, vector<1x128xf32>
    %7 = vector.broadcast %6 : vector<1x128xf32> to vector<16x128xf32>
    %8 = arith.addf %5, %7 : vector<16x128xf32>
    %cst_6 = arith.constant 0.000000e+00 : f32
    %9 = vector.broadcast %cst_6 : f32 to vector<16x128xf32>
    %10 = arith.maximumf %8, %9 : vector<16x128xf32>
    %c0_7 = arith.constant 0 : index
    %c0_8 = arith.constant 0 : index
    %11 = vector.load %arg8[%c0_7, %c0_8] : memref<16x128xf32, #tpu.memory_space<vmem>>, vector<16x128xf32>
    %12 = arith.truncf %10 : vector<16x128xf32> to vector<16x128xbf16>
    %c0_9 = arith.constant 0 : index
    %c0_10 = arith.constant 0 : index
    %13 = vector.load %arg5[%c0_9, %c0_10] : memref<128x128xbf16, #tpu.memory_space<vmem>>, vector<128x128xbf16>
    %cst_11 = arith.constant dense<0.000000e+00> : vector<16x128xf32>
    %14 = tpu.matmul %12, %13, %cst_11 {dimension_numbers = #tpu.dot_dimension_numbers<[1], [0], [0], [1], [0, 0, 1, 1], [], []>} : vector<16x128xbf16>, vector<128x128xbf16>, vector<16x128xf32> -> vector<16x128xf32>
    %15 = arith.addf %11, %14 : vector<16x128xf32>
    %c0_12 = arith.constant 0 : index
    %c0_13 = arith.constant 0 : index
    %16 = vector.load %arg8[%c0_12, %c0_13] : memref<16x128xf32, #tpu.memory_space<vmem>>, vector<16x128xf32>
    tpu.vector_store %arg8[%c0_12, %c0_13], %15 {strides = array<i32>} : memref<16x128xf32, #tpu.memory_space<vmem>>, vector<16x128xf32>,
    %c0_i32_14 = arith.constant 0 : i32
    %17 = arith.cmpi eq, %arg1, %c0_i32_14 : i32
    %18 = arith.extui %17 : i1 to i32
    %c0_i32_15 = arith.constant 0 : i32
    %19 = arith.cmpi ne, %18, %c0_i32_15 : i32
    scf.if %19 {
      %c0_16 = arith.constant 0 : index
      %c0_17 = arith.constant 0 : index
      %20 = vector.load %arg8[%c0_16, %c0_17] : memref<16x128xf32, #tpu.memory_space<vmem>>, vector<16x128xf32>
      %c0_18 = arith.constant 0 : index
      %c0_19 = arith.constant 0 : index
      %21 = vector.load %arg6[%c0_18, %c0_19] : memref<1x128xf32, #tpu.memory_space<vmem>>, vector<1x128xf32>
      %22 = vector.broadcast %21 : vector<1x128xf32> to vector<16x128xf32>
      %23 = arith.addf %20, %22 : vector<16x128xf32>
      %c0_20 = arith.constant 0 : index
      %c0_21 = arith.constant 0 : index
      %24 = vector.load %arg7[%c0_20, %c0_21] : memref<16x128xf32, #tpu.memory_space<vmem>>, vector<16x128xf32>
      tpu.vector_store %arg7[%c0_20, %c0_21], %23 {strides = array<i32>} : memref<16x128xf32, #tpu.memory_space<vmem>>, vector<16x128xf32>,
    } else {
    }
    return
  }
  func.func @transform_0(%arg0: i32, %arg1: i32) -> (i32, i32) {
    %c0_i32 = arith.constant 0 : i32
    %c0_i32_0 = arith.constant 0 : i32
    return %arg0, %c0_i32 : i32, i32
  }
  func.func @transform_1(%arg0: i32, %arg1: i32) -> (i32, i32) {
    %c0_i32 = arith.constant 0 : i32
    %c0_i32_0 = arith.constant 0 : i32
    return %c0_i32, %arg1 : i32, i32
  }
  func.func @transform_2(%arg0: i32, %arg1: i32) -> (i32, i32) {
    %c0_i32 = arith.constant 0 : i32
    %c0_i32_0 = arith.constant 0 : i32
    return %c0_i32, %arg1 : i32, i32
  }
  func.func @transform_3(%arg0: i32, %arg1: i32) -> (i32, i32) {
    %c0_i32 = arith.constant 0 : i32
    %c0_i32_0 = arith.constant 0 : i32
    return %arg1, %c0_i32 : i32, i32
  }
  func.func @transform_4(%arg0: i32, %arg1: i32) -> (i32, i32) {
    %c0_i32 = arith.constant 0 : i32
    %c0_i32_0 = arith.constant 0 : i32
    %c0_i32_1 = arith.constant 0 : i32
    return %c0_i32, %c0_i32_0 : i32, i32
  }
  func.func @transform_5(%arg0: i32, %arg1: i32) -> (i32, i32) {
    %c0_i32 = arith.constant 0 : i32
    %c0_i32_0 = arith.constant 0 : i32
    return %arg0, %c0_i32 : i32, i32
  }
}

</mosaic_0001>

<llo_original>
// kernel: _ffn_call.1
$region0: #{_ffn_call.1}
  #allocation0 [shape = 'u32[]', space=smem, size = 0x4, offset = 0x4, fixed_abs, tag = 'smem constant byte address 0x4 - core index']
  #allocation1 [shape = 'u32[144,128]{1,0:T(1,128)}', space=vmem, size = 0x12000, scoped, tag = 'internal scratch']
  #allocation2 [shape = 'f32[16,128]{1,0:T(8,128)}', space=vmem, size = 0x2000, scoped, tag = 'scratch operand']
  %s0 = inlined_call_operand.vmem [shape: bf16[16,128], index: 0, kind: input, shape index: {}]
  %s1 = inlined_call_operand.vmem [shape: bf16[128,128], index: 1, kind: input, shape index: {}]
  %s2 = inlined_call_operand.vmem [shape: f32[1,128], index: 2, kind: input, shape index: {}]
  %s3 = inlined_call_operand.vmem [shape: bf16[128,128], index: 3, kind: input, shape index: {}]
  %s4 = inlined_call_operand.vmem [shape: f32[1,128], index: 4, kind: input, shape index: {}]
  %s5 = inlined_call_operand.hbm [shape: f32[16,128], index: 5, kind: output, shape index: {}]
  %s6 = sld [smem:[#allocation0]]
  $region38: #{_ffn_call.1} parent=0
    _
  %s8 = ssub.s32 1, %s6
  %s9 = scalar_select 0, %s8, %s6
  $region1: #{_ffn_call.1} parent=0
    #allocation3 [shape = 'u8[8192]{0}', space=vmem, size = 0x2000, scoped, tag = 'output window, operand 0, single buffered']
    #allocation4 [shape = 's32[1]{0}', space=sflag, size = 0x4, scoped, tag = 'scoped memory for _ffn_call.1']
    %10 = vsyncpa [#allocation4], 0
    // Predicated region
    $region2: #{_ffn_call.1} parent=1 // pred_check
      _
    $region3: #{_ffn_call.1} parent=1 // pred_check_branch
      %12 = sbr.rel (0) target = $region5
    $region4: #{_ffn_call.1} parent=1 // pred_region
      _
    $region5: #{_ffn_call.1} parent=1 // pred_fallthru
      _
    // Predicated region
    $region6: #{_ffn_call.1} parent=1 // pred_check
      _
    $region7: #{_ffn_call.1} parent=1 // pred_check_branch
      %14 = sbr.rel (0) target = $region9
    $region8: #{_ffn_call.1} parent=1 // pred_region
      _
    $region9: #{_ffn_call.1} parent=1 // pred_fallthru
      _
    // Predicated region
    $region10: #{_ffn_call.1} parent=1 // pred_check
      _
    $region11: #{_ffn_call.1} parent=1 // pred_check_branch
      %16 = sbr.rel (0) target = $region13
    $region12: #{_ffn_call.1} parent=1 // pred_region
      _
    $region13: #{_ffn_call.1} parent=1 // pred_fallthru
      _
    // Predicated region
    $region14: #{_ffn_call.1} parent=1 // pred_check
      _
    $region15: #{_ffn_call.1} parent=1 // pred_check_branch
      %18 = sbr.rel (0) target = $region17
    $region16: #{_ffn_call.1} parent=1 // pred_region
      _
    $region17: #{_ffn_call.1} parent=1 // pred_fallthru
      _
    // Predicated region
    $region18: #{_ffn_call.1} parent=1 // pred_check
      _
    $region19: #{_ffn_call.1} parent=1 // pred_check_branch
      %20 = sbr.rel (0) target = $region21
    $region20: #{_ffn_call.1} parent=1 // pred_region
      _
    $region21: #{_ffn_call.1} parent=1 // pred_fallthru
      _
    %p22 = scmp.eq.s32.totalorder 0, 0
    // Predicated region
    $region22: #{_ffn_call.1} parent=1 // pred_check
      %p23 = pneg %p22
    $region23: #{_ffn_call.1} parent=1 // pred_check_branch
      %25 = sbr.rel (%p23) target = $region25
    $region24: #{_ffn_call.1} parent=1 // pred_region
      %26 = vst [vmem:[#allocation2] sm:$0xff] 0.0
      %27 = vst [vmem:[#allocation2 + $0x8] sm:$0xff] 0.0
    $region25: #{_ffn_call.1} parent=1 // pred_fallthru
      _
    %v28 = vld [vmem:[%s0] sm:$0xf]
    %v29 = vld [vmem:[%s0 + $0x4] sm:$0xf]
    %v30 = vld [vmem:[%s1] sm:$0xf]
    %v31 = vld [vmem:[%s1 + $0x4] sm:$0xf]
    %v32 = vld [vmem:[%s1 + $0x8] sm:$0xf]
    %v33 = vld [vmem:[%s1 + $0xc] sm:$0xf]
    %v34 = vld [vmem:[%s1 + $0x10] sm:$0xf]
    %v35 = vld [vmem:[%s1 + $0x14] sm:$0xf]
    %v36 = vld [vmem:[%s1 + $0x18] sm:$0xf]
    %v37 = vld [vmem:[%s1 + $0x1c] sm:$0xf]
    %v38 = vld [vmem:[%s1 + $0x20] sm:$0xf]
    %v39 = vld [vmem:[%s1 + $0x24] sm:$0xf]
    %v40 = vld [vmem:[%s1 + $0x28] sm:$0xf]
    %v41 = vld [vmem:[%s1 + $0x2c] sm:$0xf]
    %v42 = vld [vmem:[%s1 + $0x30] sm:$0xf]
    %v43 = vld [vmem:[%s1 + $0x34] sm:$0xf]
    %v44 = vld [vmem:[%s1 + $0x38] sm:$0xf]
    %v45 = vld [vmem:[%s1 + $0x3c] sm:$0xf]
    %v46 = vld [vmem:[%s2] sm:$0x1]
    %v48 = vlaneseq
    %v49 = vshrl.u32 %v48, 7
    %v50 = vsub.s32 0, %v49
    %v51 = vrot.slane %v46, %v50
    %v55 = vunpack.c.l.b16 %v28
    %v56 = vunpack.c.l.b16 %v29
    %v57 = vpack.c.b16 %v56, %v55
    %v75 = vunpack.c.l.b16 %v30
    %v76 = vunpack.c.l.b16 %v31
    %v77 = vunpack.c.l.b16 %v32
    %v78 = vunpack.c.l.b16 %v33
    %v79 = vunpack.c.l.b16 %v34
    %v80 = vunpack.c.l.b16 %v35
    %v81 = vunpack.c.l.b16 %v36
    %v82 = vunpack.c.l.b16 %v37
    %v83 = vunpack.c.l.b16 %v38
    %v84 = vunpack.c.l.b16 %v39
    %v85 = vunpack.c.l.b16 %v40
    %v86 = vunpack.c.l.b16 %v41
    %v87 = vunpack.c.l.b16 %v42
    %v88 = vunpack.c.l.b16 %v43
    %v89 = vunpack.c.l.b16 %v44
    %v90 = vunpack.c.l.b16 %v45
    %v91 = vpack.c.b16 %v76, %v75
    %v92 = vpack.c.b16 %v78, %v77
    %v93 = vpack.c.b16 %v80, %v79
    %v94 = vpack.c.b16 %v82, %v81
    %v95 = vpack.c.b16 %v84, %v83
    %v96 = vpack.c.b16 %v86, %v85
    %v97 = vpack.c.b16 %v88, %v87
    %v98 = vpack.c.b16 %v90, %v89
    %107 = vmatprep.subr.bf16.mxu0 0
    %108 = vmatpush1.bf16.msra.mxu0 %v98
    %109 = vmatprep.subr.bf16.mxu0 0
    %110 = vmatpush1.bf16.msra.mxu0 %v97
    %111 = vmatprep.subr.bf16.mxu0 0
    %112 = vmatpush1.bf16.msra.mxu0 %v96
    %113 = vmatprep.subr.bf16.mxu0 0
    %114 = vmatpush1.bf16.msra.mxu0 %v95
    %115 = vmatprep.subr.bf16.mxu0 0
    %116 = vmatpush1.bf16.msra.mxu0 %v94
    %117 = vmatprep.subr.bf16.mxu0 0
    %118 = vmatpush1.bf16.msra.mxu0 %v93
    %119 = vmatprep.subr.bf16.mxu0 0
    %120 = vmatpush1.bf16.msra.mxu0 %v92
    %121 = vmatprep.subr.bf16.mxu0 0
    %122 = vmatpush1.bf16.msra.mxu0 %v91
    %123 = vmatprep.subr.bf16.mxu0 0
    %124 = vmatpush2.bf16.msra.mxu0 0
    %125 = vmatprep.subr.bf16.mxu0 0
    %126 = vmatpush2.bf16.msra.mxu0 0
    %127 = vmatprep.subr.bf16.mxu0 0
    %128 = vmatpush2.bf16.msra.mxu0 0
    %129 = vmatprep.subr.bf16.mxu0 0
    %130 = vmatpush2.bf16.msra.mxu0 0
    %131 = vmatprep.subr.bf16.mxu0 0
    %132 = vmatpush2.bf16.msra.mxu0 0
    %133 = vmatprep.subr.bf16.mxu0 0
    %134 = vmatpush2.bf16.msra.mxu0 0
    %135 = vmatprep.subr.bf16.mxu0 0
    %136 = vmatpush2.bf16.msra.mxu0 0
    %137 = vmatprep.subr.bf16.mxu0 0
    %138 = vmatpush2.bf16.msra.mxu0 0
    %139 = vmatprep.mubr.bf16.mxu0 0
    %140 = vmatmul.mubr.bf16.gmra.mxu0 %v57
    %v141 = vpop.f32.mrf.mxu0
    %v142 = vadd.f32 %v51, %v141
    %v143 = vpop.f32.mrf.mxu0
    %v144 = vpop.f32.mrf.mxu0
    %v145 = vadd.f32 %v51, %v144
    %v146 = vpop.f32.mrf.mxu0
    %147 = vdwg.mxu0
    %v148 = vmax.f32 %v142, 0.0
    %v149 = vmax.f32 %v145, 0.0
    %v150 = vld [vmem:[#allocation2] sm:$0xff]
    %v151 = vld [vmem:[#allocation2 + $0x8] sm:$0xff]
    %v152 = vpack.c.bf16 %v149, %v148
    %v153 = vld [vmem:[%s3] sm:$0xf]
    %v154 = vld [vmem:[%s3 + $0x4] sm:$0xf]
    %v155 = vld [vmem:[%s3 + $0x8] sm:$0xf]
    %v156 = vld [vmem:[%s3 + $0xc] sm:$0xf]
    %v157 = vld [vmem:[%s3 + $0x10] sm:$0xf]
    %v158 = vld [vmem:[%s3 + $0x14] sm:$0xf]
    %v159 = vld [vmem:[%s3 + $0x18] sm:$0xf]
    %v160 = vld [vmem:[%s3 + $0x1c] sm:$0xf]
    %v161 = vld [vmem:[%s3 + $0x20] sm:$0xf]
    %v162 = vld [vmem:[%s3 + $0x24] sm:$0xf]
    %v163 = vld [vmem:[%s3 + $0x28] sm:$0xf]
    %v164 = vld [vmem:[%s3 + $0x2c] sm:$0xf]
    %v165 = vld [vmem:[%s3 + $0x30] sm:$0xf]
    %v166 = vld [vmem:[%s3 + $0x34] sm:$0xf]
    %v167 = vld [vmem:[%s3 + $0x38] sm:$0xf]
    %v168 = vld [vmem:[%s3 + $0x3c] sm:$0xf]
    %v185 = vunpack.c.l.b16 %v153
    %v186 = vunpack.c.l.b16 %v154
    %v187 = vunpack.c.l.b16 %v155
    %v188 = vunpack.c.l.b16 %v156
    %v189 = vunpack.c.l.b16 %v157
    %v190 = vunpack.c.l.b16 %v158
    %v191 = vunpack.c.l.b16 %v159
    %v192 = vunpack.c.l.b16 %v160
    %v193 = vunpack.c.l.b16 %v161
    %v194 = vunpack.c.l.b16 %v162
    %v195 = vunpack.c.l.b16 %v163
    %v196 = vunpack.c.l.b16 %v164
    %v197 = vunpack.c.l.b16 %v165
    %v198 = vunpack.c.l.b16 %v166
    %v199 = vunpack.c.l.b16 %v167
    %v200 = vunpack.c.l.b16 %v168
    %v201 = vpack.c.b16 %v186, %v185
    %v202 = vpack.c.b16 %v188, %v187
    %v203 = vpack.c.b16 %v190, %v189
    %v204 = vpack.c.b16 %v192, %v191
    %v205 = vpack.c.b16 %v194, %v193
    %v206 = vpack.c.b16 %v196, %v195
    %v207 = vpack.c.b16 %v198, %v197
    %v208 = vpack.c.b16 %v200, %v199
    %217 = vmatprep.subr.bf16.mxu0 0
    %218 = vmatpush1.bf16.msra.mxu0 %v208
    %219 = vmatprep.subr.bf16.mxu0 0
    %220 = vmatpush1.bf16.msra.mxu0 %v207
    %221 = vmatprep.subr.bf16.mxu0 0
    %222 = vmatpush1.bf16.msra.mxu0 %v206
    %223 = vmatprep.subr.bf16.mxu0 0
    %224 = vmatpush1.bf16.msra.mxu0 %v205
    %225 = vmatprep.subr.bf16.mxu0 0
    %226 = vmatpush1.bf16.msra.mxu0 %v204
    %227 = vmatprep.subr.bf16.mxu0 0
    %228 = vmatpush1.bf16.msra.mxu0 %v203
    %229 = vmatprep.subr.bf16.mxu0 0
    %230 = vmatpush1.bf16.msra.mxu0 %v202
    %231 = vmatprep.subr.bf16.mxu0 0
    %232 = vmatpush1.bf16.msra.mxu0 %v201
    %233 = vmatprep.subr.bf16.mxu0 0
    %234 = vmatpush2.bf16.msra.mxu0 0
    %235 = vmatprep.subr.bf16.mxu0 0
    %236 = vmatpush2.bf16.msra.mxu0 0
    %237 = vmatprep.subr.bf16.mxu0 0
    %238 = vmatpush2.bf16.msra.mxu0 0
    %239 = vmatprep.subr.bf16.mxu0 0
    %240 = vmatpush2.bf16.msra.mxu0 0
    %241 = vmatprep.subr.bf16.mxu0 0
    %242 = vmatpush2.bf16.msra.mxu0 0
    %243 = vmatprep.subr.bf16.mxu0 0
    %244 = vmatpush2.bf16.msra.mxu0 0
    %245 = vmatprep.subr.bf16.mxu0 0
    %246 = vmatpush2.bf16.msra.mxu0 0
    %247 = vmatprep.subr.bf16.mxu0 0
    %248 = vmatpush2.bf16.msra.mxu0 0
    %249 = vmatprep.mubr.bf16.mxu0 0
    %250 = vmatmul.mubr.bf16.gmra.mxu0 %v152
    %v251 = vpop.f32.mrf.mxu0
    %v252 = vadd.f32 0.0, %v251
    %v253 = vpop.f32.mrf.mxu0
    %v254 = vpop.f32.mrf.mxu0
    %v255 = vadd.f32 0.0, %v254
    %v256 = vpop.f32.mrf.mxu0
    %257 = vdwg.mxu0
    %v258 = vadd.f32 %v150, %v252
    %v259 = vadd.f32 %v151, %v255
    %260 = vst [vmem:[#allocation2] sm:$0xff] %v258
    %261 = vst [vmem:[#allocation2 + $0x8] sm:$0xff] %v259
    // Predicated region
    $region26: #{_ffn_call.1} parent=1 // pred_check
      %p262 = pneg %p22
    $region27: #{_ffn_call.1} parent=1 // pred_check_branch
      %264 = sbr.rel (%p262) target = $region29
    $region28: #{_ffn_call.1} parent=1 // pred_region
      %v265 = vld [vmem:[#allocation2] sm:$0xff]
      %v266 = vld [vmem:[#allocation2 + $0x8] sm:$0xff]
      %v267 = vld [vmem:[%s4] sm:$0x1]
      %v269 = vlaneseq
      %v270 = vshrl.u32 %v269, 7
      %v271 = vsub.s32 0, %v270
      %v272 = vrot.slane %v267, %v271
      %v274 = vadd.f32 %v265, %v272
      %v275 = vadd.f32 %v266, %v272
      %276 = vst [vmem:[#allocation3] sm:$0xff] %v274
      %277 = vst [vmem:[#allocation3 + $0x8] sm:$0xff] %v275
    $region29: #{_ffn_call.1} parent=1 // pred_fallthru
      _
    // Predicated region
    $region30: #{_ffn_call.1} parent=1 // pred_check
      _
    $region31: #{_ffn_call.1} parent=1 // pred_check_branch
      %279 = sbr.rel (0) target = $region33
    $region32: #{_ffn_call.1} parent=1 // pred_region
      %s281 = ssub.s32 256, 256
      %282 = vsyncadd [#allocation4], %s281
      %s283 = sshll.u32 [#allocation3], 4
      %s284 = int_to_ptr.vmem [resolvable:$true] %s283
      %289 = dma.vmem_to_hbm [thread:$0]  %s284, 256, %s5, [#allocation4], 128, 128, 8
    $region33: #{_ffn_call.1} parent=1 // pred_fallthru
      _
    // Predicated region
    $region34: #{_ffn_call.1} parent=1 // pred_check
      _
    $region35: #{_ffn_call.1} parent=1 // pred_check_branch
      %291 = sbr.rel (0) target = $region37
    $region36: #{_ffn_call.1} parent=1 // pred_region
      %292 = dma.done [#allocation4], 256
    $region37: #{_ffn_call.1} parent=1 // pred_fallthru
      _
    %293 = vsyncpa [#allocation4], 1

</llo_original>
